<compile_context>
chip_gen: v7x
topology: tpu7x:2x2x1
jax: 0.10.0
libtpu: 0.0.40
codegen_flags: <defaults>
</compile_context>

<pallas_src>
import functools

import jax
import jax.numpy as jnp
from jax.experimental import pallas as pl
from jax.experimental.pallas import tpu as pltpu

# Index order of alphas matches this list.
PRIMITIVES = [
    'none', 'max_pool_3x3', 'avg_pool_3x3', 'skip_connect',
    'sep_conv_3x3', 'sep_conv_5x5', 'dil_conv_3x3', 'dil_conv_5x5',
]

STEPS = 4
MULTIPLIER = 4
STEM_MULTIPLIER = 3
BN_EPS = 1e-5


def _round_up(v, m):
    return (v + m - 1) // m * m


# ----------------------------------------------------------------------------
# Pallas kernels
# ----------------------------------------------------------------------------
def _matmul_bn_kernel(a_ref, b_ref, o_ref, acc_ref, *, apply_bn):
    """Grid (row_tiles ['parallel'], k_tiles ['arbitrary']).

    A block (TR, TK) bf16, B block (TK, M) bf16 -> f32 accumulation in VMEM
    scratch; on the last K step apply training-mode BN (per output channel,
    i.e. per row, over the full M = N*Ho*Wo axis) and write the output tile.
    """
    @pl.when(pl.program_id(1) == 0)
    def _init():
        acc_ref[...] = jnp.zeros_like(acc_ref)

    acc_ref[...] += jnp.dot(a_ref[...], b_ref[...],
                            preferred_element_type=jnp.float32)

    @pl.when(pl.program_id(1) == pl.num_programs(1) - 1)
    def _finalize():
        acc = acc_ref[...]
        if apply_bn:
            mean = jnp.mean(acc, axis=1, keepdims=True)
            var = jnp.mean((acc - mean) ** 2, axis=1, keepdims=True)
            acc = (acc - mean) * jax.lax.rsqrt(var + BN_EPS)
        o_ref[...] = acc


def _pool_maxavg_bn_kernel(tap_ref, valid_ref, inv_ref, omax_ref, oavg_ref):
    """taps (T, C, M) bf16, valid (T, 1, M) f32 {0,1}, inv_cnt (1, M) f32.

    Emits BN(max-pool) and BN(avg-pool, count_include_pad=False) in one pass.
    Invalid (padding) taps are pushed to ~-3e38 (effectively -inf) for the max;
    the avg relies on zero padding plus the 1/valid_count factor.
    """
    t = tap_ref[...].astype(jnp.float32)
    v = valid_ref[...]
    mx = jnp.max(t - (1.0 - v) * jnp.float32(3.0e38), axis=0)   # (C, M)
    av = jnp.sum(t, axis=0) * inv_ref[...]                       # (C, M)

    def _bn(z):
        m = jnp.mean(z, axis=1, keepdims=True)
        var = jnp.mean((z - m) ** 2, axis=1, keepdims=True)
        return (z - m) * jax.lax.rsqrt(var + BN_EPS)

    omax_ref[...] = _bn(mx)
    oavg_ref[...] = _bn(av)


def _max_reduce_kernel(tap_ref, o_ref):
    """taps (T, C, M) f32 -> max over taps (plain MaxPool2d(2,2), no BN)."""
    o_ref[...] = jnp.max(tap_ref[...], axis=0)


def _head_kernel(x_ref, w_ref, b_ref, o_ref):
    """x (Np, C, HW), w (C, Lp), b (1, Lp): global-avg-pool + linear."""
    pooled = jnp.mean(x_ref[...], axis=2)                        # (Np, C)
    o_ref[...] = jnp.dot(pooled, w_ref[...],
                         preferred_element_type=jnp.float32) + b_ref[...]


# ----------------------------------------------------------------------------
# Pallas wrappers (called from inside jitted module-level functions)
# ----------------------------------------------------------------------------
def matmul_bn(A, B, rows_out, *, apply_bn=True):
    """A (R, K) weights, B (K, M) bf16 activations -> (rows_out, M) f32.

    Grid: (row tiles, K tiles) = ("parallel", "arbitrary").  Rows / K are
    padded with zeros (zero rows BN to zero; zero K contributes nothing).
    """
    R, K = A.shape
    Kb, M = B.shape
    assert K == Kb
    if R <= 64:
        Rp, TR = _round_up(R, 16), _round_up(R, 16)
    else:
        Rp, TR = _round_up(R, 64), 64
    if K <= 1024:
        Kp, TK = _round_up(K, 16), _round_up(K, 16)
    else:
        Kp, TK = _round_up(K, 512), 512
    A_p = jnp.pad(A.astype(jnp.bfloat16), ((0, Rp - R), (0, Kp - K)))
    B_p = jnp.pad(B.astype(jnp.bfloat16), ((0, Kp - K), (0, 0)))
    out = pl.pallas_call(
        functools.partial(_matmul_bn_kernel, apply_bn=apply_bn),
        grid=(Rp // TR, Kp // TK),
        in_specs=[pl.BlockSpec((TR, TK), lambda r, k: (r, k)),
                  pl.BlockSpec((TK, M), lambda r, k: (k, 0))],
        out_specs=pl.BlockSpec((TR, M), lambda r, k: (r, 0)),
        out_shape=jax.ShapeDtypeStruct((Rp, M), jnp.float32),
        scratch_shapes=[pltpu.VMEM((TR, M), jnp.float32)],
        compiler_params=pltpu.CompilerParams(
            dimension_semantics=("parallel", "arbitrary")),
    )(A_p, B_p)
    return out[:rows_out]


def _im2col(x, kh, kw, stride, padding, dilation):
    """x (C, N, H, W) -> B (C*kh*kw, N*Ho*Wo), Ho, Wo (rows ordered c,ky,kx)."""
    C, N, H, W = x.shape
    Ho = (H + 2 * padding - dilation * (kh - 1) - 1) // stride + 1
    Wo = (W + 2 * padding - dilation * (kw - 1) - 1) // stride + 1
    xp = jnp.pad(x, ((0, 0), (0, 0), (padding, padding), (padding, padding)))
    cols = []
    for ky in range(kh):
        for kx in range(kw):
            y0 = ky * dilation
            x0 = kx * dilation
            cols.append(xp[:, :, y0:y0 + (Ho - 1) * stride + 1:stride,
                                 x0:x0 + (Wo - 1) * stride + 1:stride])
    taps = jnp.stack(cols, axis=1)                     # (C, T, N, Ho, Wo)
    return taps.reshape(C * kh * kw, N * Ho * Wo), Ho, Wo


def _pool_taps(x, k, stride, padding):
    """x (C, N, H, W) -> taps (T, C, M), valid (T, 1, M) f32, Ho, Wo."""
    C, N, H, W = x.shape
    Ho = (H + 2 * padding - k) // stride + 1
    Wo = (W + 2 * padding - k) // stride + 1
    xp = jnp.pad(x, ((0, 0), (0, 0), (padding, padding), (padding, padding)))
    ih = jnp.arange(Ho) * stride
    iw = jnp.arange(Wo) * stride
    slices, valid = [], []
    for ky in range(k):
        for kx in range(k):
            slices.append(xp[:, :, ky:ky + (Ho - 1) * stride + 1:stride,
                                   kx:kx + (Wo - 1) * stride + 1:stride])
            vr = ((ih + ky >= padding) & (ih + ky < H + padding)).astype(jnp.float32)
            vc = ((iw + kx >= padding) & (iw + kx < W + padding)).astype(jnp.float32)
            valid.append(jnp.outer(vr, vc))
    T = k * k
    taps = jnp.stack(slices, axis=0).reshape(T, C, N * Ho * Wo)
    vst = jnp.stack(valid, axis=0)                      # (T, Ho, Wo)
    vst = jnp.broadcast_to(vst[:, None], (T, N, Ho, Wo)).reshape(T, 1, N * Ho * Wo)
    return taps, vst, Ho, Wo


def pool_maxavg_bn(x, stride):
    """MaxPool3x3+BN and AvgPool3x3(count_include_pad=False)+BN, one kernel."""
    C, N, H, W = x.shape
    taps, valid, Ho, Wo = _pool_taps(x.astype(jnp.bfloat16), 3, stride, 1)
    M = N * Ho * Wo
    inv = 1.0 / jnp.sum(valid, axis=0)                  # (1, M)
    omax, oavg = pl.pallas_call(
        _pool_maxavg_bn_kernel,
        out_shape=(jax.ShapeDtypeStruct((C, M), jnp.float32),
                   jax.ShapeDtypeStruct((C, M), jnp.float32)))(taps, valid, inv)
    return omax.reshape(C, N, Ho, Wo), oavg.reshape(C, N, Ho, Wo)


def maxpool_2x2(x):
    """MaxPool2d(2, 2) (no padding, no BN), one kernel."""
    C, N, H, W = x.shape
    Ho, Wo = H // 2, W // 2
    taps = jnp.stack([x[:, :, dy::2, dx::2][:, :, :Ho, :Wo]
                      for dy in range(2) for dx in range(2)], axis=0)
    taps = taps.reshape(4, C, N * Ho * Wo)
    out = pl.pallas_call(
        _max_reduce_kernel,
        out_shape=jax.ShapeDtypeStruct((C, N * Ho * Wo), jnp.float32))(taps)
    return out.reshape(C, N, Ho, Wo)


def conv_bn(x, w, *, stride=1, padding=0, dilation=1, relu_in=True,
            apply_bn=True):
    """[ReLU ->] Conv2d(groups=1, bias=False) [-> BN], x/out channel-first."""
    Cout, Cin, kh, kw = w.shape
    xb = jnp.maximum(x, 0.0) if relu_in else x
    xb = xb.astype(jnp.bfloat16)
    B, Ho, Wo = _im2col(xb, kh, kw, stride, padding, dilation)
    out = matmul_bn(w.reshape(Cout, Cin * kh * kw), B, Cout, apply_bn=apply_bn)
    return out.reshape(Cout, x.shape[1], Ho, Wo)


def factorized_reduce(x, w1, w2):
    """ReLU -> [1x1 stride-2 conv on x ; on x[:,:,1:,1:]] -> concat -> BN.

    Both halves are fused into one block-diagonal matmul (per-row BN == the
    BN of the channel concat, channel stats are independent)."""
    C, N, H, W = x.shape
    xr = jnp.maximum(x, 0.0).astype(jnp.bfloat16)
    b1 = xr[:, :, ::2, ::2]
    b2 = xr[:, :, 1::2, 1::2]
    Ho, Wo = b1.shape[2], b1.shape[3]
    M = N * Ho * Wo
    B = jnp.concatenate([b1.reshape(C, M), b2.reshape(C, M)], axis=0)
    half = w1.shape[0]
    z = jnp.zeros((half, C), jnp.float32)
    A = jnp.concatenate(
        [jnp.concatenate([w1[:, :, 0, 0], z], axis=1),
         jnp.concatenate([z, w2[:, :, 0, 0]], axis=1)], axis=0)
    out = matmul_bn(A, B, 2 * half, apply_bn=True)
    return out.reshape(2 * half, N, Ho, Wo)


# ----------------------------------------------------------------------------
# DARTS op helpers
# ----------------------------------------------------------------------------
def _fold_dw_pw(dw, pw):
    """dw (C,1,kh,kw), pw (Cout,C,1,1) -> fused dense weight (Cout,C,kh,kw)."""
    return pw[:, :, 0, 0][:, :, None, None] * dw[:, 0, :, :][None]


def _embed_5x5(w, dilation):
    """Embed a (3x3, d=1|2) or (5x5, d=1) kernel into the (k=5,d=1,p=2) grid."""
    Co, Ci, k, _ = w.shape
    if k == 5 and dilation == 1:
        return w
    out = jnp.zeros((Co, Ci, 5, 5), w.dtype)
    if k == 3 and dilation == 1:
        return out.at[:, :, 1:4, 1:4].set(w)
    if k == 3 and dilation == 2:
        return out.at[:, :, ::2, ::2].set(w)
    raise ValueError((k, dilation))


# ----------------------------------------------------------------------------
# jitted module-level pieces (all XLA glue fuses around the pallas_calls)
# ----------------------------------------------------------------------------
@functools.partial(jax.jit, static_argnames=('stride',))
def mixed_op(x, weights, weights2, edge_idx, p, *, stride):
    """One PC-DARTS MixedOp edge.  x is (C, N, H, W).

    random_shuffle(x) in the reference has no effect on the caller -> omitted.
    Alpha index mapping follows PRIMITIVES order; 'none' is exactly zero.
    """
    alpha = weights[edge_idx]
    edge_w = weights2[edge_idx]
    C, N, H, W = x.shape
    C4 = C // 4
    xtemp, xtemp2 = x[:C4], x[C4:]

    sep3, sep5 = p['sep_conv_3x3'], p['sep_conv_5x5']
    dil3, dil5 = p['dil_conv_3x3'], p['dil_conv_5x5']

    # --- stage 1: all 4 conv primitives in ONE batched matmul + BN ----------
    w_sep3_1 = _fold_dw_pw(sep3['dw1'], sep3['pw1'])
    w_sep5_1 = _fold_dw_pw(sep5['dw1'], sep5['pw1'])
    w_dil3 = _fold_dw_pw(dil3['dw'], dil3['pw'])
    w_dil5 = _fold_dw_pw(dil5['dw'], dil5['pw'])

    xr = jnp.maximum(xtemp, 0.0).astype(jnp.bfloat16)
    B_a, Ho, Wo = _im2col(xr, 5, 5, stride, 2, 1)        # k5 d1 p2 group
    B_b, _, _ = _im2col(xr, 5, 5, stride, 4, 2)          # k5 d2 p4 group
    Ka = C4 * 25
    A_top = jnp.concatenate([_embed_5x5(w_sep3_1, 1),
                             _embed_5x5(w_sep5_1, 1),
                             _embed_5x5(w_dil3, 2)], axis=0).reshape(3 * C4, Ka)
    A_bot = w_dil5.reshape(C4, Ka)
    A1 = jnp.concatenate(
        [jnp.concatenate([A_top, jnp.zeros((3 * C4, Ka), jnp.float32)], axis=1),
         jnp.concatenate([jnp.zeros((C4, Ka), jnp.float32), A_bot], axis=1)],
        axis=0)                                          # (4*C4, 2*Ka)
    s1_out = matmul_bn(A1, jnp.concatenate([B_a, B_b], axis=0), 4 * C4,
                       apply_bn=True).reshape(4 * C4, N, Ho, Wo)
    dil3_out = s1_out[2 * C4:3 * C4]
    dil5_out = s1_out[3 * C4:4 * C4]

    # --- stage 2: both sep-conv second convs in ONE matmul + BN -------------
    w_sep3_2 = _fold_dw_pw(sep3['dw2'], sep3['pw2'])
    w_sep5_2 = _fold_dw_pw(sep5['dw2'], sep5['pw2'])
    W2 = jnp.zeros((2 * C4, 2 * C4, 5, 5), jnp.float32)
    W2 = W2.at[:C4, :C4].set(_embed_5x5(w_sep3_2, 1))
    W2 = W2.at[C4:, C4:].set(w_sep5_2)
    y = jnp.maximum(s1_out[:2 * C4], 0.0).astype(jnp.bfloat16)
    B2, _, _ = _im2col(y, 5, 5, 1, 2, 1)
    s2_out = matmul_bn(W2.reshape(2 * C4, 2 * C4 * 25), B2, 2 * C4,
                       apply_bn=True).reshape(2 * C4, N, Ho, Wo)
    sep3_out, sep5_out = s2_out[:C4], s2_out[C4:]

    # --- pooling primitives (max + avg + BN, one kernel) --------------------
    max_out, avg_out = pool_maxavg_bn(xtemp, stride)

    # --- skip connect --------------------------------------------------------
    if stride == 1:
        skip_out = xtemp
    else:
        skip_out = factorized_reduce(xtemp, p['skip_connect']['w1'],
                                     p['skip_connect']['w2'])

    temp1 = (alpha[1] * max_out + alpha[2] * avg_out + alpha[3] * skip_out +
             alpha[4] * sep3_out + alpha[5] * sep5_out +
             alpha[6] * dil3_out + alpha[7] * dil5_out)

    if Ho == H:
        ans = jnp.concatenate([temp1, xtemp2], axis=0)
    else:
        ans = jnp.concatenate([temp1, maxpool_2x2(xtemp2)], axis=0)
    return edge_w * ans


@jax.jit
def preprocess_rcb(x, w):
    return conv_bn(x, w, stride=1, padding=0, relu_in=True, apply_bn=True)


@jax.jit
def preprocess_fr(x, w1, w2):
    return factorized_reduce(x, w1, w2)


@jax.jit
def stem_forward(x_nchw, w):
    x = jnp.transpose(x_nchw, (1, 0, 2, 3))              # NCHW -> CNHW (once)
    return conv_bn(x, w, stride=1, padding=1, relu_in=False, apply_bn=True)


@jax.jit
def head_forward(s1, cls_w, cls_b):
    """AdaptiveAvgPool2d(1) + Linear fused into one Pallas kernel."""
    C, N, H, W = s1.shape
    ncls = cls_w.shape[0]
    Np = _round_up(N, 8)
    Lp = _round_up(ncls, 128)
    x3 = jnp.pad(jnp.transpose(s1.reshape(C, N, H * W), (1, 0, 2)),
                 ((0, Np - N), (0, 0), (0, 0)))
    w = jnp.pad(cls_w.T, ((0, 0), (0, Lp - ncls)))
    b = jnp.pad(cls_b.reshape(1, ncls), ((0, 0), (0, Lp - ncls)))
    out = pl.pallas_call(
        _head_kernel,
        out_shape=jax.ShapeDtypeStruct((Np, Lp), jnp.float32))(x3, w, b)
    return out[:N, :ncls]


@jax.jit
def arch_weights(alphas, betas):
    w = jax.nn.softmax(alphas, axis=-1)
    chunks = [jax.nn.softmax(betas[0:2])]
    n, start = 3, 2
    for _ in range(STEPS - 1):
        end = start + n
        chunks.append(jax.nn.softmax(betas[start:end]))
        start = end
        n += 1
    return w, jnp.concatenate(chunks, axis=0)


# ----------------------------------------------------------------------------
# Network forward
# ----------------------------------------------------------------------------
def cell_forward(s0, s1, cp, weights, weights2):
    reduction = cp['reduction']
    if cp['reduction_prev']:
        s0 = preprocess_fr(s0, cp['pre0']['w1'], cp['pre0']['w2'])
    else:
        s0 = preprocess_rcb(s0, cp['pre0']['w'])
    s1 = preprocess_rcb(s1, cp['pre1']['w'])
    states = [s0, s1]
    offset = 0
    for i in range(STEPS):
        s = None
        for j, h in enumerate(states):
            stride = 2 if (reduction and j < 2) else 1
            contrib = mixed_op(h, weights, weights2, offset + j,
                               cp['ops'][offset + j], stride=stride)
            s = contrib if s is None else s + contrib
        offset += len(states)
        states.append(s)
    return jnp.concatenate(states[-MULTIPLIER:], axis=0)


def network_forward(params, x):
    s = stem_forward(x, params['stem_w'])
    s0 = s1 = s
    wn, wn2 = arch_weights(params['alphas_normal'], params['betas_normal'])
    wr, wr2 = arch_weights(params['alphas_reduce'], params['betas_reduce'])
    for cp in params['cells']:
        if cp['reduction']:
            weights, weights2 = wr, wr2
        else:
            weights, weights2 = wn, wn2
        s0, s1 = s1, cell_forward(s0, s1, cp, weights, weights2)
    return head_forward(s1, params['cls_w'], params['cls_b'])


# ----------------------------------------------------------------------------
# Deterministic parameter initialization (synthetic weights)
# ----------------------------------------------------------------------------
def _kinit(key, shape, scale=0.1):
    return scale * jax.random.normal(key, shape, dtype=jnp.float32)


def init_mixed_op(key, C4, stride):
    ks = jax.random.split(key, 16)
    p = {'none': {}, 'max_pool_3x3': {}, 'avg_pool_3x3': {}}
    p['sep_conv_3x3'] = {'dw1': _kinit(ks[0], (C4, 1, 3, 3)),
                         'pw1': _kinit(ks[1], (C4, C4, 1, 1)),
                         'dw2': _kinit(ks[2], (C4, 1, 3, 3)),
                         'pw2': _kinit(ks[3], (C4, C4, 1, 1))}
    p['sep_conv_5x5'] = {'dw1': _kinit(ks[4], (C4, 1, 5, 5)),
                         'pw1': _kinit(ks[5], (C4, C4, 1, 1)),
                         'dw2': _kinit(ks[6], (C4, 1, 5, 5)),
                         'pw2': _kinit(ks[7], (C4, C4, 1, 1))}
    p['dil_conv_3x3'] = {'dw': _kinit(ks[8], (C4, 1, 3, 3)),
                         'pw': _kinit(ks[9], (C4, C4, 1, 1))}
    p['dil_conv_5x5'] = {'dw': _kinit(ks[10], (C4, 1, 5, 5)),
                         'pw': _kinit(ks[11], (C4, C4, 1, 1))}
    if stride != 1:   # skip_connect -> FactorizedReduce(C4, C4)
        p['skip_connect'] = {'w1': _kinit(ks[12], (C4 // 2, C4, 1, 1)),
                             'w2': _kinit(ks[13], (C4 // 2, C4, 1, 1))}
    else:
        p['skip_connect'] = {}
    return p


def init_cell(key, C_pp, C_prev, C, reduction, reduction_prev):
    n_ops = sum(2 + i for i in range(STEPS))
    keys = jax.random.split(key, 3 + n_ops)
    cp = {'reduction': reduction, 'reduction_prev': reduction_prev}
    if reduction_prev:
        cp['pre0'] = {'w1': _kinit(keys[0], (C // 2, C_pp, 1, 1)),
                      'w2': _kinit(keys[1], (C // 2, C_pp, 1, 1))}
    else:
        cp['pre0'] = {'w': _kinit(keys[0], (C, C_pp, 1, 1))}
    cp['pre1'] = {'w': _kinit(keys[2], (C, C_prev, 1, 1))}
    ops = []
    idx = 3
    for i in range(STEPS):
        for j in range(2 + i):
            stride = 2 if (reduction and j < 2) else 1
            ops.append(init_mixed_op(keys[idx], C // 4, stride))
            idx += 1
    cp['ops'] = ops
    return cp


def init_network_params(key, C=8, num_classes=10, layers=3):
    k_all = jax.random.split(key, layers + 6)
    C_curr = STEM_MULTIPLIER * C
    params = {'stem_w': _kinit(k_all[0], (C_curr, 3, 3, 3))}
    C_pp, C_prev, C_cur = C_curr, C_curr, C
    cells = []
    reduction_prev = False
    for i in range(layers):
        if i == 2:
            C_cur *= 2
            reduction = True
        else:
            reduction = False
        cells.append(init_cell(k_all[1 + i], C_pp, C_prev, C_cur,
                               reduction, reduction_prev))
        reduction_prev = reduction
        C_pp, C_prev = C_prev, MULTIPLIER * C_cur
    params['cells'] = cells
    k_edges = sum(1 for i in range(STEPS) for _ in range(2 + i))  # 14
    num_ops = len(PRIMITIVES)
    params['alphas_normal'] = 0.001 * jax.random.normal(
        k_all[layers + 1], (k_edges, num_ops), dtype=jnp.float32)
    params['alphas_reduce'] = 0.001 * jax.random.normal(
        k_all[layers + 2], (k_edges, num_ops), dtype=jnp.float32)
    params['betas_normal'] = 0.001 * jax.random.normal(
        k_all[layers + 3], (k_edges,), dtype=jnp.float32)
    params['betas_reduce'] = 0.001 * jax.random.normal(
        k_all[layers + 4], (k_edges,), dtype=jnp.float32)
    params['cls_w'] = _kinit(k_all[layers + 5], (num_classes, C_prev))
    params['cls_b'] = jnp.zeros((num_classes,), jnp.float32)
    return params


# ----------------------------------------------------------------------------
if __name__ == "__main__":
    key = jax.random.PRNGKey(0)
    pkey, xkey = jax.random.split(key)
    params = init_network_params(pkey, C=8, num_classes=10, layers=3)
    x = jax.random.normal(xkey, (2, 3, 16, 16), dtype=jnp.float32)
    logits = network_forward(params, x)
    logits = jax.block_until_ready(logits)
    assert logits.shape == (2, 10), logits.shape
    assert bool(jnp.all(jnp.isfinite(logits)))
    print("KERNEL_OK")
</pallas_src>

<mosaic_0001>
module attributes {stable_mosaic.version = 11 : i64} {
  func.func @_matmul_bn_kernel(%arg0: i32, %arg1: i32, %arg2: memref<32x32xbf16, #tpu.memory_space<vmem>>, %arg3: memref<32x512xbf16, #tpu.memory_space<vmem>>, %arg4: memref<32x512xf32, #tpu.memory_space<vmem>>, %arg5: memref<32x512xf32, #tpu.memory_space<vmem>>) attributes {dimension_semantics = [#tpu.dimension_semantics<parallel>, #tpu.dimension_semantics<arbitrary>], iteration_bounds = array<i64: 1, 1>, scalar_prefetch = 0 : i64, scratch_operands = 1 : i64, tpu.core_type = #tpu.core_type<tc>, window_params = [{transform_indices = @transform_0, window_bounds = array<i64: 32, 32>}, {transform_indices = @transform_1, window_bounds = array<i64: 32, 512>}, {transform_indices = @transform_2, window_bounds = array<i64: 32, 512>}]} {
    %c0_i32 = arith.constant 0 : i32
    %0 = arith.cmpi eq, %arg1, %c0_i32 : i32
    %1 = arith.extui %0 : i1 to i32
    %c0_i32_0 = arith.constant 0 : i32
    %2 = arith.cmpi ne, %1, %c0_i32_0 : i32
    scf.if %2 {
      %cst_10 = arith.constant 0.000000e+00 : f32
      %12 = vector.broadcast %cst_10 : f32 to vector<32x512xf32>
      %c0_11 = arith.constant 0 : index
      %c0_12 = arith.constant 0 : index
      %13 = vector.load %arg5[%c0_11, %c0_12] : memref<32x512xf32, #tpu.memory_space<vmem>>, vector<32x512xf32>
      tpu.vector_store %arg5[%c0_11, %c0_12], %12 {strides = array<i32>} : memref<32x512xf32, #tpu.memory_space<vmem>>, vector<32x512xf32>,
    } else {
    }
    %c0 = arith.constant 0 : index
    %c0_1 = arith.constant 0 : index
    %3 = vector.load %arg5[%c0, %c0_1] : memref<32x512xf32, #tpu.memory_space<vmem>>, vector<32x512xf32>
    %c0_2 = arith.constant 0 : index
    %c0_3 = arith.constant 0 : index
    %4 = vector.load %arg2[%c0_2, %c0_3] : memref<32x32xbf16, #tpu.memory_space<vmem>>, vector<32x32xbf16>
    %c0_4 = arith.constant 0 : index
    %c0_5 = arith.constant 0 : index
    %5 = vector.load %arg3[%c0_4, %c0_5] : memref<32x512xbf16, #tpu.memory_space<vmem>>, vector<32x512xbf16>
    %cst = arith.constant dense<0.000000e+00> : vector<32x512xf32>
    %6 = tpu.matmul %4, %5, %cst {dimension_numbers = #tpu.dot_dimension_numbers<[1], [0], [0], [1], [0, 0, 1, 1], [], []>} : vector<32x32xbf16>, vector<32x512xbf16>, vector<32x512xf32> -> vector<32x512xf32>
    %7 = arith.addf %3, %6 : vector<32x512xf32>
    %c0_6 = arith.constant 0 : index
    %c0_7 = arith.constant 0 : index
    %8 = vector.load %arg5[%c0_6, %c0_7] : memref<32x512xf32, #tpu.memory_space<vmem>>, vector<32x512xf32>
    tpu.vector_store %arg5[%c0_6, %c0_7], %7 {strides = array<i32>} : memref<32x512xf32, #tpu.memory_space<vmem>>, vector<32x512xf32>,
    %c0_i32_8 = arith.constant 0 : i32
    %9 = arith.cmpi eq, %arg1, %c0_i32_8 : i32
    %10 = arith.extui %9 : i1 to i32
    %c0_i32_9 = arith.constant 0 : i32
    %11 = arith.cmpi ne, %10, %c0_i32_9 : i32
    scf.if %11 {
      %c0_10 = arith.constant 0 : index
      %c0_11 = arith.constant 0 : index
      %12 = vector.load %arg5[%c0_10, %c0_11] : memref<32x512xf32, #tpu.memory_space<vmem>>, vector<32x512xf32>
      %cst_12 = arith.constant dense<0.000000e+00> : vector<32xf32>
      %13 = vector.multi_reduction <add>, %12, %cst_12 [1] : vector<32x512xf32> to vector<32xf32>
      %14 = vector.shape_cast %13 : vector<32xf32> to vector<32x1xf32>
      %cst_13 = arith.constant 5.120000e+02 : f32
      %15 = vector.broadcast %cst_13 : f32 to vector<32x1xf32>
      %16 = arith.divf %14, %15 : vector<32x1xf32>
      %17 = vector.broadcast %16 : vector<32x1xf32> to vector<32x512xf32>
      %18 = arith.subf %12, %17 : vector<32x512xf32>
      %19 = arith.mulf %18, %18 : vector<32x512xf32>
      %cst_14 = arith.constant dense<0.000000e+00> : vector<32xf32>
      %20 = vector.multi_reduction <add>, %19, %cst_14 [1] : vector<32x512xf32> to vector<32xf32>
      %21 = vector.shape_cast %20 : vector<32xf32> to vector<32x1xf32>
      %cst_15 = arith.constant 5.120000e+02 : f32
      %22 = vector.broadcast %cst_15 : f32 to vector<32x1xf32>
      %23 = arith.divf %21, %22 : vector<32x1xf32>
      %24 = vector.broadcast %16 : vector<32x1xf32> to vector<32x512xf32>
      %25 = arith.subf %12, %24 : vector<32x512xf32>
      %cst_16 = arith.constant 9.99999974E-6 : f32
      %26 = vector.broadcast %cst_16 : f32 to vector<32x1xf32>
      %27 = arith.addf %23, %26 : vector<32x1xf32>
      %28 = math.rsqrt %27 : vector<32x1xf32>
      %29 = vector.broadcast %28 : vector<32x1xf32> to vector<32x512xf32>
      %30 = arith.mulf %25, %29 : vector<32x512xf32>
      %c0_17 = arith.constant 0 : index
      %c0_18 = arith.constant 0 : index
      %31 = vector.load %arg4[%c0_17, %c0_18] : memref<32x512xf32, #tpu.memory_space<vmem>>, vector<32x512xf32>
      tpu.vector_store %arg4[%c0_17, %c0_18], %30 {strides = array<i32>} : memref<32x512xf32, #tpu.memory_space<vmem>>, vector<32x512xf32>,
    } else {
    }
    return
  }
  func.func @transform_0(%arg0: i32, %arg1: i32) -> (i32, i32) {
    %c0_i32 = arith.constant 0 : i32
    return %arg0, %arg1 : i32, i32
  }
  func.func @transform_1(%arg0: i32, %arg1: i32) -> (i32, i32) {
    %c0_i32 = arith.constant 0 : i32
    %c0_i32_0 = arith.constant 0 : i32
    return %arg1, %c0_i32 : i32, i32
  }
  func.func @transform_2(%arg0: i32, %arg1: i32) -> (i32, i32) {
    %c0_i32 = arith.constant 0 : i32
    %c0_i32_0 = arith.constant 0 : i32
    return %arg0, %c0_i32 : i32, i32
  }
}

</mosaic_0001>

<llo_original>
// kernel: stem_forward.1
$region0: #{stem_forward.1}
  #allocation0 [shape = 'u32[]', space=smem, size = 0x4, offset = 0x4, fixed_abs, tag = 'smem constant byte address 0x4 - core index']
  #allocation1 [shape = 'u32[144,128]{1,0:T(1,128)}', space=vmem, size = 0x12000, scoped, tag = 'internal scratch']
  #allocation2 [shape = 'f32[32,512]{1,0:T(8,128)}', space=vmem, size = 0x10000, scoped, tag = 'scratch operand']
  %s0 = inlined_call_operand.vmem [shape: bf16[32,32], index: 0, kind: input, shape index: {}]
  %s1 = inlined_call_operand.vmem [shape: bf16[32,512], index: 1, kind: input, shape index: {}]
  %s2 = inlined_call_operand.vmem [shape: f32[32,512], index: 2, kind: output, shape index: {}]
  %s3 = sld [smem:[#allocation0]]
  $region26: #{stem_forward.1} parent=0
    _
  %s5 = ssub.s32 1, %s3
  %s6 = scalar_select 0, %s5, %s3
  // Predicated region
  $region2: #{stem_forward.1} parent=0 // pred_check
    _
  $region3: #{stem_forward.1} parent=0 // pred_check_branch
    %8 = sbr.rel (0) target = $region5
  $region4: #{stem_forward.1} parent=0 // pred_region
    _
  $region5: #{stem_forward.1} parent=0 // pred_fallthru
    _
  // Predicated region
  $region6: #{stem_forward.1} parent=0 // pred_check
    _
  $region7: #{stem_forward.1} parent=0 // pred_check_branch
    %10 = sbr.rel (0) target = $region9
  $region8: #{stem_forward.1} parent=0 // pred_region
    _
  $region9: #{stem_forward.1} parent=0 // pred_fallthru
    _
  %p12 = scmp.eq.s32.totalorder 0, 0
  // Predicated region
  $region10: #{stem_forward.1} parent=0 // pred_check
    %p13 = pneg %p12
  $region11: #{stem_forward.1} parent=0 // pred_check_branch
    %15 = sbr.rel (%p13) target = $region13
  $region12: #{stem_forward.1} parent=0 // pred_region
    %16 = vst [vmem:[#allocation2] sm:$0xff] 0.0
    %17 = vst [vmem:[#allocation2 + $0x8] sm:$0xff] 0.0
    %18 = vst [vmem:[#allocation2 + $0x10] sm:$0xff] 0.0
    %19 = vst [vmem:[#allocation2 + $0x18] sm:$0xff] 0.0
    %20 = vst [vmem:[#allocation2 + $0x20] sm:$0xff] 0.0
    %21 = vst [vmem:[#allocation2 + $0x28] sm:$0xff] 0.0
    %22 = vst [vmem:[#allocation2 + $0x30] sm:$0xff] 0.0
    %23 = vst [vmem:[#allocation2 + $0x38] sm:$0xff] 0.0
    %24 = vst [vmem:[#allocation2 + $0x40] sm:$0xff] 0.0
    %25 = vst [vmem:[#allocation2 + $0x48] sm:$0xff] 0.0
    %26 = vst [vmem:[#allocation2 + $0x50] sm:$0xff] 0.0
    %27 = vst [vmem:[#allocation2 + $0x58] sm:$0xff] 0.0
    %28 = vst [vmem:[#allocation2 + $0x60] sm:$0xff] 0.0
    %29 = vst [vmem:[#allocation2 + $0x68] sm:$0xff] 0.0
    %30 = vst [vmem:[#allocation2 + $0x70] sm:$0xff] 0.0
    %31 = vst [vmem:[#allocation2 + $0x78] sm:$0xff] 0.0
  $region13: #{stem_forward.1} parent=0 // pred_fallthru
    _
  %v32 = vld [vmem:[#allocation2] sm:$0xff]
  %v33 = vld [vmem:[#allocation2 + $0x8] sm:$0xff]
  %v34 = vld [vmem:[#allocation2 + $0x10] sm:$0xff]
  %v35 = vld [vmem:[#allocation2 + $0x18] sm:$0xff]
  %v36 = vld [vmem:[#allocation2 + $0x20] sm:$0xff]
  %v37 = vld [vmem:[#allocation2 + $0x28] sm:$0xff]
  %v38 = vld [vmem:[#allocation2 + $0x30] sm:$0xff]
  %v39 = vld [vmem:[#allocation2 + $0x38] sm:$0xff]
  %v40 = vld [vmem:[#allocation2 + $0x40] sm:$0xff]
  %v41 = vld [vmem:[#allocation2 + $0x48] sm:$0xff]
  %v42 = vld [vmem:[#allocation2 + $0x50] sm:$0xff]
  %v43 = vld [vmem:[#allocation2 + $0x58] sm:$0xff]
  %v44 = vld [vmem:[#allocation2 + $0x60] sm:$0xff]
  %v45 = vld [vmem:[#allocation2 + $0x68] sm:$0xff]
  %v46 = vld [vmem:[#allocation2 + $0x70] sm:$0xff]
  %v47 = vld [vmem:[#allocation2 + $0x78] sm:$0xff]
  %v48 = vld [vmem:[%s0] sm:$0xf]
  %v49 = vld [vmem:[%s0 + $0x4] sm:$0xf]
  %v50 = vld [vmem:[%s0 + $0x8] sm:$0xf]
  %v51 = vld [vmem:[%s0 + $0xc] sm:$0xf]
  %v52 = vld [vmem:[%s1] sm:$0xff]
  %v53 = vld [vmem:[%s1 + $0x8] sm:$0xff]
  %v54 = vld [vmem:[%s1 + $0x10] sm:$0xff]
  %v55 = vld [vmem:[%s1 + $0x18] sm:$0xff]
  %v56 = vld [vmem:[%s1 + $0x20] sm:$0xff]
  %v57 = vld [vmem:[%s1 + $0x28] sm:$0xff]
  %v58 = vld [vmem:[%s1 + $0x30] sm:$0xff]
  %v59 = vld [vmem:[%s1 + $0x38] sm:$0xff]
  %v64 = vunpack.c.l.b16 %v48
  %v65 = vunpack.c.l.b16 %v49
  %v66 = vunpack.c.l.b16 %v50
  %v67 = vunpack.c.l.b16 %v51
  %v68 = vpack.c.b16 %v65, %v64
  %v69 = vpack.c.b16 %v67, %v66
  %v78 = vunpack.c.l.b16 %v52
  %v79 = vunpack.c.h.b16 %v52
  %v80 = vunpack.c.l.b16 %v53
  %v81 = vunpack.c.h.b16 %v53
  %v82 = vunpack.c.l.b16 %v54
  %v83 = vunpack.c.h.b16 %v54
  %v84 = vunpack.c.l.b16 %v55
  %v85 = vunpack.c.h.b16 %v55
  %v86 = vunpack.c.l.b16 %v56
  %v87 = vunpack.c.h.b16 %v56
  %v88 = vunpack.c.l.b16 %v57
  %v89 = vunpack.c.h.b16 %v57
  %v90 = vunpack.c.l.b16 %v58
  %v91 = vunpack.c.h.b16 %v58
  %v92 = vunpack.c.l.b16 %v59
  %v93 = vunpack.c.h.b16 %v59
  %v94 = vpack.c.b16 %v82, %v78
  %v95 = vpack.c.b16 %v83, %v79
  %v96 = vpack.c.b16 %v84, %v80
  %v97 = vpack.c.b16 %v85, %v81
  %v98 = vpack.c.b16 %v90, %v86
  %v99 = vpack.c.b16 %v91, %v87
  %v100 = vpack.c.b16 %v92, %v88
  %v101 = vpack.c.b16 %v93, %v89
  %vm110 = vcmask 261120
  %v112 = vsel %vm110, %v68, 0
  %v115 = vsel %vm110, %v69, 0
  %117 = vmatprep.subr.bf16.mxu0 %v95
  %118 = vmatpush1.bf16.msra.mxu0 %v94
  %119 = vmatprep.subr.bf16.mxu0 %v99
  %120 = vmatpush1.bf16.msra.mxu0 %v98
  %121 = vmatprep.subr.bf16.mxu0 0
  %122 = vmatpush1.bf16.msra.mxu0 0
  %123 = vmatprep.subr.bf16.mxu0 0
  %124 = vmatpush1.bf16.msra.mxu0 0
  %125 = vmatprep.subr.bf16.mxu0 0
  %126 = vmatpush1.bf16.msra.mxu0 0
  %127 = vmatprep.subr.bf16.mxu0 0
  %128 = vmatpush1.bf16.msra.mxu0 0
  %129 = vmatprep.subr.bf16.mxu0 0
  %130 = vmatpush1.bf16.msra.mxu0 0
  %131 = vmatprep.subr.bf16.mxu0 0
  %132 = vmatpush1.bf16.msra.mxu0 0
  %133 = vmatprep.subr.bf16.mxu0 0
  %134 = vmatpush1.bf16.msra.mxu0 0
  %135 = vmatprep.subr.bf16.mxu0 0
  %136 = vmatpush1.bf16.msra.mxu0 0
  %137 = vmatprep.subr.bf16.mxu0 0
  %138 = vmatpush1.bf16.msra.mxu0 0
  %139 = vmatprep.subr.bf16.mxu0 0
  %140 = vmatpush1.bf16.msra.mxu0 0
  %141 = vmatprep.subr.bf16.mxu0 0
  %142 = vmatpush1.bf16.msra.mxu0 0
  %143 = vmatprep.subr.bf16.mxu0 0
  %144 = vmatpush1.bf16.msra.mxu0 0
  %145 = vmatprep.subr.bf16.mxu0 0
  %146 = vmatpush1.bf16.msra.mxu0 0
  %147 = vmatprep.subr.bf16.mxu0 0
  %148 = vmatpush1.bf16.msra.mxu0 0
  %149 = vmatprep.mubr.bf16.mxu0 0
  %150 = vmatmul.mubr.bf16.gmra.mrb[0].mxu0 %v112
  %v151 = vpop.f32.mrb[0].mxu0
  %v152 = vadd.f32 0.0, %v151
  %v153 = vpop.f32.mrb[0].mxu0
  %v154 = vadd.f32 0.0, %v153
  %v155 = vpop.f32.mrb[0].mxu0
  %v156 = vadd.f32 0.0, %v155
  %v157 = vpop.f32.mrb[0].mxu0
  %v158 = vadd.f32 0.0, %v157
  %159 = vmatprep.mubr.bf16.mxu0 0
  %160 = vmatmul.mubr.bf16.gmra.mrb[0].mxu0 %v115
  %v161 = vpop.f32.mrb[0].mxu0
  %v162 = vadd.f32 0.0, %v161
  %v163 = vpop.f32.mrb[0].mxu0
  %v164 = vadd.f32 0.0, %v163
  %v165 = vpop.f32.mrb[0].mxu0
  %v166 = vadd.f32 0.0, %v165
  %v167 = vpop.f32.mrb[0].mxu0
  %v168 = vadd.f32 0.0, %v167
  %169 = vdwg.mxu0
  %170 = vmatprep.subr.bf16.mxu0 %v97
  %171 = vmatpush1.bf16.msra.mxu0 %v96
  %172 = vmatprep.subr.bf16.mxu0 %v101
  %173 = vmatpush1.bf16.msra.mxu0 %v100
  %174 = vmatprep.subr.bf16.mxu0 0
  %175 = vmatpush1.bf16.msra.mxu0 0
  %176 = vmatprep.subr.bf16.mxu0 0
  %177 = vmatpush1.bf16.msra.mxu0 0
  %178 = vmatprep.subr.bf16.mxu0 0
  %179 = vmatpush1.bf16.msra.mxu0 0
  %180 = vmatprep.subr.bf16.mxu0 0
  %181 = vmatpush1.bf16.msra.mxu0 0
  %182 = vmatprep.subr.bf16.mxu0 0
  %183 = vmatpush1.bf16.msra.mxu0 0
  %184 = vmatprep.subr.bf16.mxu0 0
  %185 = vmatpush1.bf16.msra.mxu0 0
  %186 = vmatprep.subr.bf16.mxu0 0
  %187 = vmatpush1.bf16.msra.mxu0 0
  %188 = vmatprep.subr.bf16.mxu0 0
  %189 = vmatpush1.bf16.msra.mxu0 0
  %190 = vmatprep.subr.bf16.mxu0 0
  %191 = vmatpush1.bf16.msra.mxu0 0
  %192 = vmatprep.subr.bf16.mxu0 0
  %193 = vmatpush1.bf16.msra.mxu0 0
  %194 = vmatprep.subr.bf16.mxu0 0
  %195 = vmatpush1.bf16.msra.mxu0 0
  %196 = vmatprep.subr.bf16.mxu0 0
  %197 = vmatpush1.bf16.msra.mxu0 0
  %198 = vmatprep.subr.bf16.mxu0 0
  %199 = vmatpush1.bf16.msra.mxu0 0
  %200 = vmatprep.subr.bf16.mxu0 0
  %201 = vmatpush1.bf16.msra.mxu0 0
  %202 = vmatprep.mubr.bf16.mxu0 0
  %203 = vmatmul.mubr.bf16.gmra.mrb[0].mxu0 %v112
  %v204 = vpop.f32.mrb[0].mxu0
  %v205 = vadd.f32 0.0, %v204
  %v206 = vpop.f32.mrb[0].mxu0
  %v207 = vadd.f32 0.0, %v206
  %v208 = vpop.f32.mrb[0].mxu0
  %v209 = vadd.f32 0.0, %v208
  %v210 = vpop.f32.mrb[0].mxu0
  %v211 = vadd.f32 0.0, %v210
  %212 = vmatprep.mubr.bf16.mxu0 0
  %213 = vmatmul.mubr.bf16.gmra.mrb[0].mxu0 %v115
  %v214 = vpop.f32.mrb[0].mxu0
  %v215 = vadd.f32 0.0, %v214
  %v216 = vpop.f32.mrb[0].mxu0
  %v217 = vadd.f32 0.0, %v216
  %v218 = vpop.f32.mrb[0].mxu0
  %v219 = vadd.f32 0.0, %v218
  %v220 = vpop.f32.mrb[0].mxu0
  %v221 = vadd.f32 0.0, %v220
  %222 = vdwg.mxu0
  %v223 = vadd.f32 %v32, %v152
  %v224 = vadd.f32 %v33, %v154
  %v225 = vadd.f32 %v34, %v205
  %v226 = vadd.f32 %v35, %v207
  %v227 = vadd.f32 %v36, %v156
  %v228 = vadd.f32 %v37, %v158
  %v229 = vadd.f32 %v38, %v209
  %v230 = vadd.f32 %v39, %v211
  %v231 = vadd.f32 %v40, %v162
  %v232 = vadd.f32 %v41, %v164
  %v233 = vadd.f32 %v42, %v215
  %v234 = vadd.f32 %v43, %v217
  %v235 = vadd.f32 %v44, %v166
  %v236 = vadd.f32 %v45, %v168
  %v237 = vadd.f32 %v46, %v219
  %v238 = vadd.f32 %v47, %v221
  %239 = vst [vmem:[#allocation2] sm:$0xff] %v223
  %240 = vst [vmem:[#allocation2 + $0x8] sm:$0xff] %v224
  %241 = vst [vmem:[#allocation2 + $0x10] sm:$0xff] %v225
  %242 = vst [vmem:[#allocation2 + $0x18] sm:$0xff] %v226
  %243 = vst [vmem:[#allocation2 + $0x20] sm:$0xff] %v227
  %244 = vst [vmem:[#allocation2 + $0x28] sm:$0xff] %v228
  %245 = vst [vmem:[#allocation2 + $0x30] sm:$0xff] %v229
  %246 = vst [vmem:[#allocation2 + $0x38] sm:$0xff] %v230
  %247 = vst [vmem:[#allocation2 + $0x40] sm:$0xff] %v231
  %248 = vst [vmem:[#allocation2 + $0x48] sm:$0xff] %v232
  %249 = vst [vmem:[#allocation2 + $0x50] sm:$0xff] %v233
  %250 = vst [vmem:[#allocation2 + $0x58] sm:$0xff] %v234
  %251 = vst [vmem:[#allocation2 + $0x60] sm:$0xff] %v235
  %252 = vst [vmem:[#allocation2 + $0x68] sm:$0xff] %v236
  %253 = vst [vmem:[#allocation2 + $0x70] sm:$0xff] %v237
  %254 = vst [vmem:[#allocation2 + $0x78] sm:$0xff] %v238
  // Predicated region
  $region14: #{stem_forward.1} parent=0 // pred_check
    %p255 = pneg %p12
  $region15: #{stem_forward.1} parent=0 // pred_check_branch
    %257 = sbr.rel (%p255) target = $region17
  $region16: #{stem_forward.1} parent=0 // pred_region
    %v258 = vld [vmem:[#allocation2] sm:$0xff]
    %v259 = vld [vmem:[#allocation2 + $0x8] sm:$0xff]
    %v260 = vld [vmem:[#allocation2 + $0x10] sm:$0xff]
    %v261 = vld [vmem:[#allocation2 + $0x18] sm:$0xff]
    %v262 = vld [vmem:[#allocation2 + $0x20] sm:$0xff]
    %v263 = vld [vmem:[#allocation2 + $0x28] sm:$0xff]
    %v264 = vld [vmem:[#allocation2 + $0x30] sm:$0xff]
    %v265 = vld [vmem:[#allocation2 + $0x38] sm:$0xff]
    %v266 = vld [vmem:[#allocation2 + $0x40] sm:$0xff]
    %v267 = vld [vmem:[#allocation2 + $0x48] sm:$0xff]
    %v268 = vld [vmem:[#allocation2 + $0x50] sm:$0xff]
    %v269 = vld [vmem:[#allocation2 + $0x58] sm:$0xff]
    %v270 = vld [vmem:[#allocation2 + $0x60] sm:$0xff]
    %v271 = vld [vmem:[#allocation2 + $0x68] sm:$0xff]
    %v272 = vld [vmem:[#allocation2 + $0x70] sm:$0xff]
    %v273 = vld [vmem:[#allocation2 + $0x78] sm:$0xff]
    %v274 = vadd.f32 %v258, %v259
    %v275 = vadd.f32 %v274, %v260
    %v276 = vadd.f32 %v275, %v261
    %277 = vadd.xlane.f32.xlu0 %v276
    %v278 = vpop.xlane.xlu0 %277
    %v279 = vadd.f32 %v262, %v263
    %v280 = vadd.f32 %v279, %v264
    %v281 = vadd.f32 %v280, %v265
    %282 = vadd.xlane.f32.xlu0 %v281
    %v283 = vpop.xlane.xlu0 %282
    %v284 = vadd.f32 %v266, %v267
    %v285 = vadd.f32 %v284, %v268
    %v286 = vadd.f32 %v285, %v269
    %287 = vadd.xlane.f32.xlu0 %v286
    %v288 = vpop.xlane.xlu0 %287
    %v289 = vadd.f32 %v270, %v271
    %v290 = vadd.f32 %v289, %v272
    %v291 = vadd.f32 %v290, %v273
    %292 = vadd.xlane.f32.xlu0 %v291
    %v293 = vpop.xlane.xlu0 %292
    %v294 = vrcp.pop 512.0
    %v295 = vmul.f32 %v278, %v294
    %v296 = vmul.f32 %v283, %v294
    %v297 = vmul.f32 %v288, %v294
    %v298 = vmul.f32 %v293, %v294
    %v299 = vsub.f32 %v258, %v295
    %v300 = vsub.f32 %v259, %v295
    %v301 = vsub.f32 %v260, %v295
    %v302 = vsub.f32 %v261, %v295
    %v303 = vsub.f32 %v262, %v296
    %v304 = vsub.f32 %v263, %v296
    %v305 = vsub.f32 %v264, %v296
    %v306 = vsub.f32 %v265, %v296
    %v307 = vsub.f32 %v266, %v297
    %v308 = vsub.f32 %v267, %v297
    %v309 = vsub.f32 %v268, %v297
    %v310 = vsub.f32 %v269, %v297
    %v311 = vsub.f32 %v270, %v298
    %v312 = vsub.f32 %v271, %v298
    %v313 = vsub.f32 %v272, %v298
    %v314 = vsub.f32 %v273, %v298
    %v315 = vmul.f32 %v299, %v299
    %v316 = vmul.f32 %v300, %v300
    %v317 = vmul.f32 %v301, %v301
    %v318 = vmul.f32 %v302, %v302
    %v319 = vmul.f32 %v303, %v303
    %v320 = vmul.f32 %v304, %v304
    %v321 = vmul.f32 %v305, %v305
    %v322 = vmul.f32 %v306, %v306
    %v323 = vmul.f32 %v307, %v307
    %v324 = vmul.f32 %v308, %v308
    %v325 = vmul.f32 %v309, %v309
    %v326 = vmul.f32 %v310, %v310
    %v327 = vmul.f32 %v311, %v311
    %v328 = vmul.f32 %v312, %v312
    %v329 = vmul.f32 %v313, %v313
    %v330 = vmul.f32 %v314, %v314
    %v331 = vadd.f32 %v315, %v316
    %v332 = vadd.f32 %v331, %v317
    %v333 = vadd.f32 %v332, %v318
    %334 = vadd.xlane.f32.xlu0 %v333
    %v335 = vpop.xlane.xlu0 %334
    %v336 = vadd.f32 %v319, %v320
    %v337 = vadd.f32 %v336, %v321
    %v338 = vadd.f32 %v337, %v322
    %339 = vadd.xlane.f32.xlu0 %v338
    %v340 = vpop.xlane.xlu0 %339
    %v341 = vadd.f32 %v323, %v324
    %v342 = vadd.f32 %v341, %v325
    %v343 = vadd.f32 %v342, %v326
    %344 = vadd.xlane.f32.xlu0 %v343
    %v345 = vpop.xlane.xlu0 %344
    %v346 = vadd.f32 %v327, %v328
    %v347 = vadd.f32 %v346, %v329
    %v348 = vadd.f32 %v347, %v330
    %349 = vadd.xlane.f32.xlu0 %v348
    %v350 = vpop.xlane.xlu0 %349
    %v351 = vmul.f32 %v335, %v294
    %v352 = vmul.f32 %v340, %v294
    %v353 = vmul.f32 %v345, %v294
    %v354 = vmul.f32 %v350, %v294
    %v355 = vadd.f32 %v351, 1e-05
    %v356 = vadd.f32 %v352, 1e-05
    %v357 = vadd.f32 %v353, 1e-05
    %v358 = vadd.f32 %v354, 1e-05
    %v359 = vrsqrt.pop %v355
    %v360 = vrsqrt.pop %v356
    %v361 = vrsqrt.pop %v357
    %v362 = vrsqrt.pop %v358
    %v363 = vmul.f32 %v299, %v359
    %v364 = vmul.f32 %v300, %v359
    %v365 = vmul.f32 %v301, %v359
    %v366 = vmul.f32 %v302, %v359
    %v367 = vmul.f32 %v303, %v360
    %v368 = vmul.f32 %v304, %v360
    %v369 = vmul.f32 %v305, %v360
    %v370 = vmul.f32 %v306, %v360
    %v371 = vmul.f32 %v307, %v361
    %v372 = vmul.f32 %v308, %v361
    %v373 = vmul.f32 %v309, %v361
    %v374 = vmul.f32 %v310, %v361
    %v375 = vmul.f32 %v311, %v362
    %v376 = vmul.f32 %v312, %v362
    %v377 = vmul.f32 %v313, %v362
    %v378 = vmul.f32 %v314, %v362
    %379 = vst [vmem:[%s2] sm:$0xff] %v363
    %380 = vst [vmem:[%s2 + $0x8] sm:$0xff] %v364
    %381 = vst [vmem:[%s2 + $0x10] sm:$0xff] %v365
    %382 = vst [vmem:[%s2 + $0x18] sm:$0xff] %v366
    %383 = vst [vmem:[%s2 + $0x20] sm:$0xff] %v367
    %384 = vst [vmem:[%s2 + $0x28] sm:$0xff] %v368
    %385 = vst [vmem:[%s2 + $0x30] sm:$0xff] %v369
    %386 = vst [vmem:[%s2 + $0x38] sm:$0xff] %v370
    %387 = vst [vmem:[%s2 + $0x40] sm:$0xff] %v371
    %388 = vst [vmem:[%s2 + $0x48] sm:$0xff] %v372
    %389 = vst [vmem:[%s2 + $0x50] sm:$0xff] %v373
    %390 = vst [vmem:[%s2 + $0x58] sm:$0xff] %v374
    %391 = vst [vmem:[%s2 + $0x60] sm:$0xff] %v375
    %392 = vst [vmem:[%s2 + $0x68] sm:$0xff] %v376
    %393 = vst [vmem:[%s2 + $0x70] sm:$0xff] %v377
    %394 = vst [vmem:[%s2 + $0x78] sm:$0xff] %v378
  $region17: #{stem_forward.1} parent=0 // pred_fallthru
    _
  // Predicated region
  $region18: #{stem_forward.1} parent=0 // pred_check
    _
  $region19: #{stem_forward.1} parent=0 // pred_check_branch
    %396 = sbr.rel (0) target = $region21
  $region20: #{stem_forward.1} parent=0 // pred_region
    _
  $region21: #{stem_forward.1} parent=0 // pred_fallthru
    _
  // Predicated region
  $region22: #{stem_forward.1} parent=0 // pred_check
    _
  $region23: #{stem_forward.1} parent=0 // pred_check_branch
    %398 = sbr.rel (0) target = $region25
  $region24: #{stem_forward.1} parent=0 // pred_region
    _
  $region25: #{stem_forward.1} parent=0 // pred_fallthru
    _

</llo_original>
